<compile_context>
chip_gen: v6e
topology: v6e:2x2x1
jax: 0.10.0
libtpu: 0.0.40
codegen_flags: <defaults>
</compile_context>

<pallas_src>
import functools

import jax
import jax.numpy as jnp
from jax import lax
from jax.experimental import pallas as pl
from jax.experimental.pallas import tpu as pltpu

EPS = 1e-8  # matches F.cosine_similarity default eps


def _round_up(x, m):
    return (x + m - 1) // m * m


def _contrastive_kernel(x_ref, y_ref, lab_ref, msk_ref, out_ref,
                        dot_acc, sxx_acc, syy_acc, *, margin, inv_tau):
    # x, y: (TB, TD); lab, msk: (TB, 1); out: (1, 8, 128); scratch: (TB, 1) f32
    k = pl.program_id(1)

    @pl.when(k == 0)
    def _():
        dot_acc[...] = jnp.zeros_like(dot_acc)
        sxx_acc[...] = jnp.zeros_like(sxx_acc)
        syy_acc[...] = jnp.zeros_like(syy_acc)

    x = x_ref[...].astype(jnp.float32)
    y = y_ref[...].astype(jnp.float32)
    dot_acc[...] += jnp.sum(x * y, axis=1, keepdims=True)
    sxx_acc[...] += jnp.sum(x * x, axis=1, keepdims=True)
    syy_acc[...] += jnp.sum(y * y, axis=1, keepdims=True)

    @pl.when(k == pl.num_programs(1) - 1)
    def _():
        lab = lab_ref[...].astype(jnp.float32)
        msk = msk_ref[...].astype(jnp.float32)
        # PyTorch clamps the product of norms: cos = dot / max(|x|*|y|, eps)
        denom_sq = jnp.maximum(sxx_acc[...] * syy_acc[...], EPS * EPS)
        cos_sim = dot_acc[...] * lax.rsqrt(denom_sq)      # exact rsqrt -> EUP
        cdt = (1.0 - cos_sim) * inv_tau
        hinge = jnp.maximum(margin - cdt, 0.0)
        per_ex = ((1.0 - lab) * cdt * cdt + lab * hinge * hinge) * msk
        partial = jnp.sum(per_ex)                         # this B-tile's sum
        out_ref[...] = jnp.broadcast_to(partial, out_ref.shape)


def contrastive_loss_cosine_distance(output1, output2, label,
                                     margin=1.0, tau=1.0):
    """output1, output2: (B, D) float (f32 or bf16); label: (B,).
    Returns scalar f32 loss matching the PyTorch module."""
    B, D = output1.shape
    bytes_per_el = jnp.dtype(output1.dtype).itemsize

    # ---- tile sizing (VMEM-budget safe on v5e / v6e / v7x) -----------------
    TD_MAX = 2048
    if D <= TD_MAX:
        TD, D_pad = D, D
    else:
        TD = TD_MAX
        D_pad = _round_up(D, TD)

    # keep each input tile <= ~2 MiB: 2 inputs x 2 pipeline buffers ~= 8 MiB,
    # inside even v5e's 16 MiB default scoped VMEM.
    tile_budget = 2 * 1024 * 1024
    tb = max(8, (tile_budget // (TD * bytes_per_el)) // 8 * 8)
    TB = int(min(512, tb, _round_up(B, 8)))
    B_pad = _round_up(B, TB)
    num_b = B_pad // TB
    num_d = D_pad // TD

    # ---- padding + validity mask (mean divides by the TRUE B) -------------
    x, y = output1, output2
    if (B_pad, D_pad) != (B, D):
        x = jnp.pad(x, ((0, B_pad - B), (0, D_pad - D)))
        y = jnp.pad(y, ((0, B_pad - B), (0, D_pad - D)))
    lab = jnp.pad(label.astype(jnp.float32).reshape(B, 1),
                  ((0, B_pad - B), (0, 0)))
    msk = jnp.pad(jnp.ones((B, 1), jnp.float32), ((0, B_pad - B), (0, 0)))

    kernel = functools.partial(_contrastive_kernel,
                               margin=float(margin),
                               inv_tau=float(1.0 / tau))

    cost = pl.CostEstimate(
        flops=int(6 * B_pad * D_pad + 12 * B_pad),
        transcendentals=int(B_pad),
        bytes_accessed=int(2 * B_pad * D_pad * bytes_per_el
                           + 8 * B_pad + num_b * 8 * 128 * 4),
    )

    partials = pl.pallas_call(
        kernel,
        out_shape=jax.ShapeDtypeStruct((num_b, 8, 128), jnp.float32),
        grid_spec=pltpu.PrefetchScalarGridSpec(
            num_scalar_prefetch=0,
            grid=(num_b, num_d),
            in_specs=[
                pl.BlockSpec((TB, TD), lambda i, k: (i, k)),
                pl.BlockSpec((TB, TD), lambda i, k: (i, k)),
                pl.BlockSpec((TB, 1), lambda i, k: (i, 0)),
                pl.BlockSpec((TB, 1), lambda i, k: (i, 0)),
            ],
            out_specs=pl.BlockSpec((1, 8, 128), lambda i, k: (i, 0, 0)),
            scratch_shapes=[
                pltpu.VMEM((TB, 1), jnp.float32),
                pltpu.VMEM((TB, 1), jnp.float32),
                pltpu.VMEM((TB, 1), jnp.float32),
            ],
        ),
        compiler_params=pltpu.CompilerParams(
            dimension_semantics=("parallel", "arbitrary"),
            vmem_limit_bytes=32 * 1024 * 1024,
        ),
        cost_estimate=cost,
    )(x, y, lab, msk)

    # one partial per B tile (lane-dense block, value broadcast); final mean here
    return jnp.sum(partials[:, 0, 0]) / B


def _reference_loss(o1, o2, lab, margin=1.0, tau=1.0):
    dot = jnp.sum(o1 * o2, axis=1)
    n1 = jnp.sqrt(jnp.sum(o1 * o1, axis=1))
    n2 = jnp.sqrt(jnp.sum(o2 * o2, axis=1))
    cos = dot / jnp.maximum(n1 * n2, EPS)
    d = (1.0 - cos) / tau
    return jnp.mean((1.0 - lab) * d ** 2
                    + lab * jnp.maximum(margin - d, 0.0) ** 2)


if __name__ == "__main__":
    key = jax.random.PRNGKey(0)
    k1, k2, k3, k4, k5, k6 = jax.random.split(key, 6)

    # small shape consistent with the module (batch=8, hidden=32)
    B, D = 8, 32
    output1 = jax.random.normal(k1, (B, D), dtype=jnp.float32)
    output2 = jax.random.normal(k2, (B, D), dtype=jnp.float32)
    label = jax.random.bernoulli(k3, 0.5, (B,)).astype(jnp.float32)

    loss = contrastive_loss_cosine_distance(output1, output2, label)
    loss = jax.block_until_ready(loss)
    ref = _reference_loss(output1, output2, label)
    assert jnp.allclose(loss, ref, rtol=1e-5, atol=1e-5), (loss, ref)

    # second shape exercising padding / row masking (B not a multiple of 8)
    B2, D2 = 50, 200
    o1 = jax.random.normal(k4, (B2, D2), dtype=jnp.float32)
    o2 = jax.random.normal(k5, (B2, D2), dtype=jnp.float32)
    lab2 = jax.random.bernoulli(k6, 0.5, (B2,)).astype(jnp.float32)
    loss2 = jax.block_until_ready(
        contrastive_loss_cosine_distance(o1, o2, lab2))
    ref2 = _reference_loss(o1, o2, lab2)
    assert jnp.allclose(loss2, ref2, rtol=1e-5, atol=1e-5), (loss2, ref2)

    print("KERNEL_OK")
</pallas_src>

<mosaic_0001>
module attributes {stable_mosaic.version = 11 : i64} {
  func.func @_contrastive_kernel(%arg0: i32, %arg1: i32, %arg2: memref<8x32xf32, #tpu.memory_space<vmem>>, %arg3: memref<8x32xf32, #tpu.memory_space<vmem>>, %arg4: memref<8x1xf32, #tpu.memory_space<vmem>>, %arg5: memref<8x1xf32, #tpu.memory_space<vmem>>, %arg6: memref<1x8x128xf32, #tpu.memory_space<vmem>>, %arg7: memref<8x1xf32, #tpu.memory_space<vmem>>, %arg8: memref<8x1xf32, #tpu.memory_space<vmem>>, %arg9: memref<8x1xf32, #tpu.memory_space<vmem>>) attributes {dimension_semantics = [#tpu.dimension_semantics<parallel>, #tpu.dimension_semantics<arbitrary>], iteration_bounds = array<i64: 1, 1>, scalar_prefetch = 0 : i64, scratch_operands = 3 : i64, tpu.core_type = #tpu.core_type<tc>, window_params = [{transform_indices = @transform_0, window_bounds = array<i64: 8, 32>}, {transform_indices = @transform_1, window_bounds = array<i64: 8, 32>}, {transform_indices = @transform_2, window_bounds = array<i64: 8, 1>}, {transform_indices = @transform_3, window_bounds = array<i64: 8, 1>}, {transform_indices = @transform_4, window_bounds = array<i64: 1, 8, 128>}]} {
    %c0_i32 = arith.constant 0 : i32
    %0 = arith.cmpi eq, %arg1, %c0_i32 : i32
    %1 = arith.extui %0 : i1 to i32
    %c0_i32_0 = arith.constant 0 : i32
    %2 = arith.cmpi ne, %1, %c0_i32_0 : i32
    scf.if %2 {
      %cst_20 = arith.constant 0.000000e+00 : f32
      %26 = vector.broadcast %cst_20 : f32 to vector<8x1xf32>
      %c0_21 = arith.constant 0 : index
      %c0_22 = arith.constant 0 : index
      %27 = vector.load %arg7[%c0_21, %c0_22] : memref<8x1xf32, #tpu.memory_space<vmem>>, vector<8x1xf32>
      tpu.vector_store %arg7[%c0_21, %c0_22], %26 {strides = array<i32>} : memref<8x1xf32, #tpu.memory_space<vmem>>, vector<8x1xf32>,
      %cst_23 = arith.constant 0.000000e+00 : f32
      %28 = vector.broadcast %cst_23 : f32 to vector<8x1xf32>
      %c0_24 = arith.constant 0 : index
      %c0_25 = arith.constant 0 : index
      %29 = vector.load %arg8[%c0_24, %c0_25] : memref<8x1xf32, #tpu.memory_space<vmem>>, vector<8x1xf32>
      tpu.vector_store %arg8[%c0_24, %c0_25], %28 {strides = array<i32>} : memref<8x1xf32, #tpu.memory_space<vmem>>, vector<8x1xf32>,
      %cst_26 = arith.constant 0.000000e+00 : f32
      %30 = vector.broadcast %cst_26 : f32 to vector<8x1xf32>
      %c0_27 = arith.constant 0 : index
      %c0_28 = arith.constant 0 : index
      %31 = vector.load %arg9[%c0_27, %c0_28] : memref<8x1xf32, #tpu.memory_space<vmem>>, vector<8x1xf32>
      tpu.vector_store %arg9[%c0_27, %c0_28], %30 {strides = array<i32>} : memref<8x1xf32, #tpu.memory_space<vmem>>, vector<8x1xf32>,
    } else {
    }
    %c0 = arith.constant 0 : index
    %c0_1 = arith.constant 0 : index
    %3 = vector.load %arg2[%c0, %c0_1] : memref<8x32xf32, #tpu.memory_space<vmem>>, vector<8x32xf32>
    %c0_2 = arith.constant 0 : index
    %c0_3 = arith.constant 0 : index
    %4 = vector.load %arg3[%c0_2, %c0_3] : memref<8x32xf32, #tpu.memory_space<vmem>>, vector<8x32xf32>
    %c0_4 = arith.constant 0 : index
    %c0_5 = arith.constant 0 : index
    %5 = vector.load %arg7[%c0_4, %c0_5] : memref<8x1xf32, #tpu.memory_space<vmem>>, vector<8x1xf32>
    %6 = arith.mulf %3, %4 : vector<8x32xf32>
    %cst = arith.constant dense<0.000000e+00> : vector<8xf32>
    %7 = vector.multi_reduction <add>, %6, %cst [1] : vector<8x32xf32> to vector<8xf32>
    %8 = vector.shape_cast %7 : vector<8xf32> to vector<8x1xf32>
    %9 = arith.addf %5, %8 : vector<8x1xf32>
    %c0_6 = arith.constant 0 : index
    %c0_7 = arith.constant 0 : index
    %10 = vector.load %arg7[%c0_6, %c0_7] : memref<8x1xf32, #tpu.memory_space<vmem>>, vector<8x1xf32>
    tpu.vector_store %arg7[%c0_6, %c0_7], %9 {strides = array<i32>} : memref<8x1xf32, #tpu.memory_space<vmem>>, vector<8x1xf32>,
    %c0_8 = arith.constant 0 : index
    %c0_9 = arith.constant 0 : index
    %11 = vector.load %arg8[%c0_8, %c0_9] : memref<8x1xf32, #tpu.memory_space<vmem>>, vector<8x1xf32>
    %12 = arith.mulf %3, %3 : vector<8x32xf32>
    %cst_10 = arith.constant dense<0.000000e+00> : vector<8xf32>
    %13 = vector.multi_reduction <add>, %12, %cst_10 [1] : vector<8x32xf32> to vector<8xf32>
    %14 = vector.shape_cast %13 : vector<8xf32> to vector<8x1xf32>
    %15 = arith.addf %11, %14 : vector<8x1xf32>
    %c0_11 = arith.constant 0 : index
    %c0_12 = arith.constant 0 : index
    %16 = vector.load %arg8[%c0_11, %c0_12] : memref<8x1xf32, #tpu.memory_space<vmem>>, vector<8x1xf32>
    tpu.vector_store %arg8[%c0_11, %c0_12], %15 {strides = array<i32>} : memref<8x1xf32, #tpu.memory_space<vmem>>, vector<8x1xf32>,
    %c0_13 = arith.constant 0 : index
    %c0_14 = arith.constant 0 : index
    %17 = vector.load %arg9[%c0_13, %c0_14] : memref<8x1xf32, #tpu.memory_space<vmem>>, vector<8x1xf32>
    %18 = arith.mulf %4, %4 : vector<8x32xf32>
    %cst_15 = arith.constant dense<0.000000e+00> : vector<8xf32>
    %19 = vector.multi_reduction <add>, %18, %cst_15 [1] : vector<8x32xf32> to vector<8xf32>
    %20 = vector.shape_cast %19 : vector<8xf32> to vector<8x1xf32>
    %21 = arith.addf %17, %20 : vector<8x1xf32>
    %c0_16 = arith.constant 0 : index
    %c0_17 = arith.constant 0 : index
    %22 = vector.load %arg9[%c0_16, %c0_17] : memref<8x1xf32, #tpu.memory_space<vmem>>, vector<8x1xf32>
    tpu.vector_store %arg9[%c0_16, %c0_17], %21 {strides = array<i32>} : memref<8x1xf32, #tpu.memory_space<vmem>>, vector<8x1xf32>,
    %c0_i32_18 = arith.constant 0 : i32
    %23 = arith.cmpi eq, %arg1, %c0_i32_18 : i32
    %24 = arith.extui %23 : i1 to i32
    %c0_i32_19 = arith.constant 0 : i32
    %25 = arith.cmpi ne, %24, %c0_i32_19 : i32
    scf.if %25 {
      %c0_20 = arith.constant 0 : index
      %c0_21 = arith.constant 0 : index
      %26 = vector.load %arg4[%c0_20, %c0_21] : memref<8x1xf32, #tpu.memory_space<vmem>>, vector<8x1xf32>
      %c0_22 = arith.constant 0 : index
      %c0_23 = arith.constant 0 : index
      %27 = vector.load %arg5[%c0_22, %c0_23] : memref<8x1xf32, #tpu.memory_space<vmem>>, vector<8x1xf32>
      %c0_24 = arith.constant 0 : index
      %c0_25 = arith.constant 0 : index
      %28 = vector.load %arg8[%c0_24, %c0_25] : memref<8x1xf32, #tpu.memory_space<vmem>>, vector<8x1xf32>
      %c0_26 = arith.constant 0 : index
      %c0_27 = arith.constant 0 : index
      %29 = vector.load %arg9[%c0_26, %c0_27] : memref<8x1xf32, #tpu.memory_space<vmem>>, vector<8x1xf32>
      %30 = arith.mulf %28, %29 : vector<8x1xf32>
      %cst_28 = arith.constant 1.000000e-16 : f32
      %31 = vector.broadcast %cst_28 : f32 to vector<8x1xf32>
      %32 = arith.maximumf %30, %31 : vector<8x1xf32>
      %c0_29 = arith.constant 0 : index
      %c0_30 = arith.constant 0 : index
      %33 = vector.load %arg7[%c0_29, %c0_30] : memref<8x1xf32, #tpu.memory_space<vmem>>, vector<8x1xf32>
      %34 = math.rsqrt %32 : vector<8x1xf32>
      %35 = arith.mulf %33, %34 : vector<8x1xf32>
      %cst_31 = arith.constant 1.000000e+00 : f32
      %36 = vector.broadcast %cst_31 : f32 to vector<8x1xf32>
      %37 = arith.subf %36, %35 : vector<8x1xf32>
      %cst_32 = arith.constant 1.000000e+00 : f32
      %38 = vector.broadcast %cst_32 : f32 to vector<8x1xf32>
      %39 = arith.mulf %37, %38 : vector<8x1xf32>
      %cst_33 = arith.constant 1.000000e+00 : f32
      %40 = vector.broadcast %cst_33 : f32 to vector<8x1xf32>
      %41 = arith.subf %40, %39 : vector<8x1xf32>
      %cst_34 = arith.constant 0.000000e+00 : f32
      %42 = vector.broadcast %cst_34 : f32 to vector<8x1xf32>
      %43 = arith.maximumf %41, %42 : vector<8x1xf32>
      %cst_35 = arith.constant 1.000000e+00 : f32
      %44 = vector.broadcast %cst_35 : f32 to vector<8x1xf32>
      %45 = arith.subf %44, %26 : vector<8x1xf32>
      %46 = arith.mulf %45, %39 : vector<8x1xf32>
      %47 = arith.mulf %46, %39 : vector<8x1xf32>
      %48 = arith.mulf %26, %43 : vector<8x1xf32>
      %49 = arith.mulf %48, %43 : vector<8x1xf32>
      %50 = arith.addf %47, %49 : vector<8x1xf32>
      %51 = arith.mulf %50, %27 : vector<8x1xf32>
      %52 = vector.shape_cast %51 : vector<8x1xf32> to vector<1x8x1xf32>
      %cst_36 = arith.constant dense<0.000000e+00> : vector<1xf32>
      %53 = vector.multi_reduction <add>, %52, %cst_36 [1, 2] : vector<1x8x1xf32> to vector<1xf32>
      %54 = vector.shape_cast %53 : vector<1xf32> to vector<1x1x1xf32>
      %55 = vector.extract %54[0, 0, 0] : f32 from vector<1x1x1xf32>
      %56 = vector.broadcast %55 : f32 to vector<1x8x128xf32>
      %c0_37 = arith.constant 0 : index
      %c0_38 = arith.constant 0 : index
      %c0_39 = arith.constant 0 : index
      %57 = vector.load %arg6[%c0_37, %c0_38, %c0_39] : memref<1x8x128xf32, #tpu.memory_space<vmem>>, vector<1x8x128xf32>
      tpu.vector_store %arg6[%c0_37, %c0_38, %c0_39], %56 {strides = array<i32>} : memref<1x8x128xf32, #tpu.memory_space<vmem>>, vector<1x8x128xf32>,
    } else {
    }
    return
  }
  func.func @transform_0(%arg0: i32, %arg1: i32) -> (i32, i32) {
    %c0_i32 = arith.constant 0 : i32
    return %arg0, %arg1 : i32, i32
  }
  func.func @transform_1(%arg0: i32, %arg1: i32) -> (i32, i32) {
    %c0_i32 = arith.constant 0 : i32
    return %arg0, %arg1 : i32, i32
  }
  func.func @transform_2(%arg0: i32, %arg1: i32) -> (i32, i32) {
    %c0_i32 = arith.constant 0 : i32
    %c0_i32_0 = arith.constant 0 : i32
    return %arg0, %c0_i32 : i32, i32
  }
  func.func @transform_3(%arg0: i32, %arg1: i32) -> (i32, i32) {
    %c0_i32 = arith.constant 0 : i32
    %c0_i32_0 = arith.constant 0 : i32
    return %arg0, %c0_i32 : i32, i32
  }
  func.func @transform_4(%arg0: i32, %arg1: i32) -> (i32, i32, i32) {
    %c0_i32 = arith.constant 0 : i32
    %c0_i32_0 = arith.constant 0 : i32
    %c0_i32_1 = arith.constant 0 : i32
    return %arg0, %c0_i32, %c0_i32_0 : i32, i32, i32
  }
}

</mosaic_0001>

<llo_original>
// kernel: tpu_custom_call.1
$region0: #{tpu_custom_call.1}
  #allocation0 [shape = 'u32[]', space=smem, size = 0x4, offset = 0x4, fixed_abs, tag = 'smem constant byte address 0x4 - core index']
  #allocation1 [shape = 'u32[144,128]{1,0:T(1,128)}', space=vmem, size = 0x12000, scoped, tag = 'internal scratch']
  #allocation2 [shape = 'f32[8,1]{1,0:T(8,128)}', space=vmem, size = 0x1000, scoped, tag = 'scratch operand']
  #allocation3 [shape = 'f32[8,1]{1,0:T(8,128)}', space=vmem, size = 0x1000, scoped, tag = 'scratch operand']
  #allocation4 [shape = 'f32[8,1]{1,0:T(8,128)}', space=vmem, size = 0x1000, scoped, tag = 'scratch operand']
  %s0 = inlined_call_operand.vmem [shape: f32[8,32], index: 0, kind: input, shape index: {}]
  %s1 = inlined_call_operand.vmem [shape: f32[8,32], index: 1, kind: input, shape index: {}]
  %s2 = inlined_call_operand.vmem [shape: f32[8,1], index: 2, kind: input, shape index: {}]
  %s3 = inlined_call_operand.vmem [shape: f32[8,1], index: 3, kind: input, shape index: {}]
  %s4 = inlined_call_operand.hbm [shape: f32[1,8,128], index: 4, kind: output, shape index: {}]
  %s5 = sld [smem:[#allocation0]]
  $region34: #{tpu_custom_call.1} parent=0
    _
  %s7 = ssub.s32 1, %s5
  %s8 = scalar_select 0, %s7, %s5
  $region1: #{tpu_custom_call.1} parent=0
    #allocation5 [shape = 'u8[4096]{0}', space=vmem, size = 0x1000, scoped, tag = 'output window, operand 0, single buffered']
    #allocation6 [shape = 's32[1]{0}', space=sflag, size = 0x4, scoped, tag = 'scoped memory for tpu_custom_call.1']
    %9 = vsyncpa [#allocation6], 0
    // Predicated region
    $region2: #{tpu_custom_call.1} parent=1 // pred_check
      _
    $region3: #{tpu_custom_call.1} parent=1 // pred_check_branch
      %11 = sbr.rel (0) target = $region5
    $region4: #{tpu_custom_call.1} parent=1 // pred_region
      _
    $region5: #{tpu_custom_call.1} parent=1 // pred_fallthru
      _
    // Predicated region
    $region6: #{tpu_custom_call.1} parent=1 // pred_check
      _
    $region7: #{tpu_custom_call.1} parent=1 // pred_check_branch
      %13 = sbr.rel (0) target = $region9
    $region8: #{tpu_custom_call.1} parent=1 // pred_region
      _
    $region9: #{tpu_custom_call.1} parent=1 // pred_fallthru
      _
    // Predicated region
    $region10: #{tpu_custom_call.1} parent=1 // pred_check
      _
    $region11: #{tpu_custom_call.1} parent=1 // pred_check_branch
      %15 = sbr.rel (0) target = $region13
    $region12: #{tpu_custom_call.1} parent=1 // pred_region
      _
    $region13: #{tpu_custom_call.1} parent=1 // pred_fallthru
      _
    // Predicated region
    $region14: #{tpu_custom_call.1} parent=1 // pred_check
      _
    $region15: #{tpu_custom_call.1} parent=1 // pred_check_branch
      %17 = sbr.rel (0) target = $region17
    $region16: #{tpu_custom_call.1} parent=1 // pred_region
      _
    $region17: #{tpu_custom_call.1} parent=1 // pred_fallthru
      _
    %p18 = scmp.eq.s32.totalorder 0, 0
    // Predicated region
    $region18: #{tpu_custom_call.1} parent=1 // pred_check
      %p19 = pneg %p18
    $region19: #{tpu_custom_call.1} parent=1 // pred_check_branch
      %21 = sbr.rel (%p19) target = $region21
    $region20: #{tpu_custom_call.1} parent=1 // pred_region
      %vm22 = vcmask 7168
      %23 = vst.msk [vmem:[#allocation2] sm:$0xff] %vm22, 0.0
      %24 = vst.msk [vmem:[#allocation3] sm:$0xff] %vm22, 0.0
      %25 = vst.msk [vmem:[#allocation4] sm:$0xff] %vm22, 0.0
    $region21: #{tpu_custom_call.1} parent=1 // pred_fallthru
      _
    %v26 = vld [vmem:[%s0] sm:$0xff]
    %v27 = vld [vmem:[%s1] sm:$0xff]
    %v28 = vld [vmem:[#allocation2] sm:$0xff]
    %v29 = vmul.f32 %v26, %v27
    %vm30 = vcmask 261120
    %v31 = vsel %vm30, %v29, 0.0
    %32 = vadd.xlane.f32.xlu0 %v31
    %v33 = vpop.xlane.xlu0 %32
    %v34 = vadd.f32 %v28, %v33
    %vm35 = vcmask 7168
    %36 = vst.msk [vmem:[#allocation2] sm:$0xff] %vm35, %v34
    %v37 = vld [vmem:[#allocation3] sm:$0xff]
    %v38 = vmul.f32 %v26, %v26
    %v39 = vsel %vm30, %v38, 0.0
    %40 = vadd.xlane.f32.xlu0 %v39
    %v41 = vpop.xlane.xlu0 %40
    %v42 = vadd.f32 %v37, %v41
    %43 = vst.msk [vmem:[#allocation3] sm:$0xff] %vm35, %v42
    %v44 = vld [vmem:[#allocation4] sm:$0xff]
    %v45 = vmul.f32 %v27, %v27
    %v46 = vsel %vm30, %v45, 0.0
    %47 = vadd.xlane.f32.xlu0 %v46
    %v48 = vpop.xlane.xlu0 %47
    %v49 = vadd.f32 %v44, %v48
    %50 = vst.msk [vmem:[#allocation4] sm:$0xff] %vm35, %v49
    // Predicated region
    $region22: #{tpu_custom_call.1} parent=1 // pred_check
      %p51 = pneg %p18
    $region23: #{tpu_custom_call.1} parent=1 // pred_check_branch
      %53 = sbr.rel (%p51) target = $region25
    $region24: #{tpu_custom_call.1} parent=1 // pred_region
      %v54 = vld [vmem:[%s2] sm:$0xff]
      %v55 = vld [vmem:[%s3] sm:$0xff]
      %v56 = vld [vmem:[#allocation3] sm:$0xff]
      %v57 = vld [vmem:[#allocation4] sm:$0xff]
      %v58 = vmul.f32 %v56, %v57
      %v59 = vmax.f32 %v58, 1e-16
      %v60 = vld [vmem:[#allocation2] sm:$0xff]
      %v61 = vrsqrt.pop %v59
      %v62 = vmul.f32 %v60, %v61
      %v63 = vsub.f32 1.0, %v62
      %v64 = vsub.f32 1.0, %v63
      %v65 = vmax.f32 %v64, 0.0
      %v66 = vsub.f32 1.0, %v54
      %v67 = vmul.f32 %v66, %v63
      %v68 = vmul.f32 %v67, %v63
      %v69 = vmul.f32 %v54, %v65
      %v70 = vmul.f32 %v69, %v65
      %v71 = vadd.f32 %v68, %v70
      %v72 = vmul.f32 %v71, %v55
      %v73 = vsel %vm35, %v72, 0.0
      %74 = vadd.xlane.f32.xlu0 %v73
      %v75 = vpop.xlane.xlu0 %74
      %v76 = vrot.slane %v75, 4
      %v77 = vadd.f32 %v75, %v76
      %v78 = vrot.slane %v77, 2
      %v79 = vadd.f32 %v77, %v78
      %v80 = vrot.slane %v79, 1
      %v81 = vadd.f32 %v79, %v80
      %s82 = vtos %v81
      %v83 = vstv %s82
      %84 = vst [vmem:[#allocation5] sm:$0xff] %v83
    $region25: #{tpu_custom_call.1} parent=1 // pred_fallthru
      _
    // Predicated region
    $region26: #{tpu_custom_call.1} parent=1 // pred_check
      _
    $region27: #{tpu_custom_call.1} parent=1 // pred_check_branch
      %86 = sbr.rel (0) target = $region29
    $region28: #{tpu_custom_call.1} parent=1 // pred_region
      %s88 = ssub.s32 128, 128
      %89 = vsyncadd [#allocation6], %s88
      %s91 = sshll.u32 [#allocation5], 4
      %s92 = int_to_ptr.vmem [resolvable:$true] %s91
      %94 = dma.vmem_to_hbm [thread:$0]  %s92, 128, %s4, [#allocation6]
    $region29: #{tpu_custom_call.1} parent=1 // pred_fallthru
      _
    // Predicated region
    $region30: #{tpu_custom_call.1} parent=1 // pred_check
      _
    $region31: #{tpu_custom_call.1} parent=1 // pred_check_branch
      %96 = sbr.rel (0) target = $region33
    $region32: #{tpu_custom_call.1} parent=1 // pred_region
      %97 = dma.done [#allocation6], 128
    $region33: #{tpu_custom_call.1} parent=1 // pred_fallthru
      _
    %98 = vsyncpa [#allocation6], 1

</llo_original>
